<compile_context>
chip_gen: v5e
topology: v5e:2x2
jax: 0.10.0
libtpu: 0.0.40
codegen_flags: <defaults>
</compile_context>

<pallas_src>
import functools

import numpy as np
import jax
import jax.numpy as jnp
from jax import lax
from jax.experimental import pallas as pl
from jax.experimental.pallas import tpu as pltpu


# Precision for the in-kernel Gram contraction. None = Mosaic default for f32
# operands; set to jax.lax.Precision.HIGHEST if bit-tight f32 accumulation of
# the Gram matrix is required near the hinge boundary.
_GRAM_PRECISION = None


def _gram_tile_kernel(a_ref, b_ref, ir_ref, ic_ref, g_ref, *, precision):
    """One (tm, tn) tile of G = E_n @ E_n^T.

    Normalization is applied by scaling the output tile with the precomputed
    row / column inverse norms instead of materializing normalized embeddings.
    """
    g = lax.dot_general(
        a_ref[...], b_ref[...],
        dimension_numbers=(((1,), (1,)), ((), ())),   # NT contraction on the MXU
        preferred_element_type=jnp.float32,
        precision=precision)
    g_ref[...] = g * ir_ref[...] * ic_ref[...]        # (tm,tn)*(tm,1)*(1,tn)


def _hinge_partial_kernel(x_ref, psum_ref, *, beta, use_softplus):
    """(tile_rows, 128) pre-combined hinge arguments -> (8, 128) partial sum.

    Padded lanes carry a large-negative sentinel, so no mask is needed:
    ReLU gives exactly 0 and the stable softplus underflows to exactly 0.
    """
    x = x_ref[...]
    if use_softplus:
        bx = beta * x
        # Numerically stable softplus: (max(bx,0) + log1p(exp(-|bx|))) / beta.
        loss = (jnp.maximum(bx, 0.0) + jnp.log1p(jnp.exp(-jnp.abs(bx)))) / beta
    else:
        loss = jnp.maximum(x, 0.0)                    # F.relu
    # Regroup sublanes and accumulate across vregs (cheap VPU adds, mem-bound kernel).
    psum_ref[...] = jnp.sum(loss.reshape(-1, 8, 128), axis=0)


def online_triplet_loss(embeddings, triplets, margin, *, beta=1.0,
                        use_softplus=False, tile_rows=2048, gram_tile=256):
    """Pallas implementation of OnlineTripletLoss.forward (given triplet indices)."""
    n, d = map(int, embeddings.shape)
    t = int(triplets.shape[0])
    if t == 0:
        # Guard: PyTorch's .mean() of an empty tensor is NaN; return 0.0 instead.
        return jnp.float32(0.0)

    e = embeddings.astype(jnp.float32)

    # ---- Inverse norms + diagonal of the normalized Gram (tiny, fuses in XLA).
    # F.normalize(p=2, dim=1): x / max(||x||, 1e-12) == x * rsqrt(max(||x||^2, 1e-24)).
    sumsq = jnp.sum(e * e, axis=1)                     # (n,)
    inv = lax.rsqrt(jnp.maximum(sumsq, 1e-24))         # (n,)  rsqrt: no sqrt+divide
    diag = sumsq * inv * inv                           # ||e_n||^2: 1.0 except zero-norm rows

    # ---- Kernel 1: tiled Gram matrix G = E_n @ E_n^T on the MXU.
    if n <= gram_tile:
        tm = n_pad = n                                 # single full-extent block (always legal)
    else:
        tm = gram_tile                                 # 256: fills v6e/v7x MXU; fine on v5e too
        n_pad = -(-n // tm) * tm
    if n_pad > n:
        e_g = jnp.pad(e, ((0, n_pad - n), (0, 0)))     # zero rows
        inv_g = jnp.pad(inv, (0, n_pad - n))           # zero inv -> padded Gram entries are 0
    else:
        e_g, inv_g = e, inv
    inv_row = inv_g.reshape(n_pad, 1)
    inv_col = inv_g.reshape(1, n_pad)

    # Double-buffered f32 tile footprint; raise the scoped VMEM limit only if needed.
    needed = 2 * 4 * (2 * tm * d + tm * tm + 2 * tm)
    gram_cp = {"dimension_semantics": ("parallel", "parallel")}
    if needed > 12 * 2**20:
        gram_cp["vmem_limit_bytes"] = int(min(needed + (4 << 20), 64 << 20))
    # TODO(synk): add a K-reduction grid axis for very large D (each (tm, D) tile must fit VMEM).
    gram = pl.pallas_call(
        functools.partial(_gram_tile_kernel, precision=_GRAM_PRECISION),
        out_shape=jax.ShapeDtypeStruct((n_pad, n_pad), jnp.float32),
        grid=(n_pad // tm, n_pad // tm),
        in_specs=[pl.BlockSpec((tm, d), lambda i, j: (i, 0)),
                  pl.BlockSpec((tm, d), lambda i, j: (j, 0)),
                  pl.BlockSpec((tm, 1), lambda i, j: (i, 0)),
                  pl.BlockSpec((1, tm), lambda i, j: (0, j))],
        out_specs=pl.BlockSpec((tm, tm), lambda i, j: (i, j)),
        compiler_params=pltpu.CompilerParams(**gram_cp),
    )(e_g, e_g, inv_row, inv_col)

    # ---- Glue: one fused gather for the two off-diagonal terms, trivial 1-D
    # gathers for the diagonal, precombined into a single hinge-argument vector
    #   x = d_ap - d_an + margin = (diag[p] - diag[n]) + 2*(G[a,n] - G[a,p]) + margin.
    a_i, p_i, n_i = triplets[:, 0], triplets[:, 1], triplets[:, 2]
    off_idx = jnp.concatenate([a_i * n_pad + p_i, a_i * n_pad + n_i])
    g_off = jnp.take(gram.reshape(-1), off_idx)        # single gather launch (2*T scalars)
    g_ap, g_an = g_off[:t], g_off[t:]
    x = (jnp.take(diag, p_i) - jnp.take(diag, n_i)) + 2.0 * (g_an - g_ap) + margin

    # ---- Lane-dense (rows, 128) slab, sentinel-padded (no in-kernel mask).
    tile_rows = max(8, (int(tile_rows) // 8) * 8)
    rows = -(-t // 128)                                # ceil(T / 128)
    rows = -(-rows // 8) * 8                           # multiple of 8 sublanes
    if rows >= 16:                                     # keep >= 2 grid steps for megacore
        tile_rows = min(tile_rows, max(8, (rows // 2 // 8) * 8))
    tile_rows = min(tile_rows, rows)
    rows = -(-rows // tile_rows) * tile_rows
    num_tiles = rows // tile_rows
    t_pad = rows * 128

    # Sentinel chosen so beta*pad <= -128: ReLU -> 0 and softplus exp underflows to 0.
    pad_val = -max(1.0e9, 128.0 / max(float(beta), 1e-30))
    x_slab = jnp.pad(x, (0, t_pad - t), constant_values=pad_val).reshape(rows, 128)

    partials = pl.pallas_call(
        functools.partial(_hinge_partial_kernel, beta=float(beta),
                          use_softplus=bool(use_softplus)),
        out_shape=jax.ShapeDtypeStruct((num_tiles * 8, 128), jnp.float32),
        grid=(num_tiles,),
        in_specs=[pl.BlockSpec((tile_rows, 128), lambda i: (i, 0))],
        out_specs=pl.BlockSpec((8, 128), lambda i: (i, 0)),
        compiler_params=pltpu.CompilerParams(
            dimension_semantics=("parallel",)),        # no carried state -> 2-TC sharding OK
    )(x_slab)

    # Final cross-block reduction + mean (tiny) in the wrapper.
    return jnp.sum(partials) / jnp.float32(t)


def all_valid_triplets(labels):
    """Deterministic batch-all triplet selector (stands in for triplet_selector)."""
    labels = np.asarray(labels)
    n = labels.shape[0]
    trips = []
    for a in range(n):
        for p in range(n):
            if p == a or labels[p] != labels[a]:
                continue
            for neg in range(n):
                if labels[neg] == labels[a]:
                    continue
                trips.append((a, p, neg))
    return np.asarray(trips, dtype=np.int32)


def reference_loss(embeddings, triplets, margin, *, beta=1.0, use_softplus=False):
    e = embeddings / jnp.maximum(
        jnp.linalg.norm(embeddings, axis=1, keepdims=True), 1e-12)
    ap = jnp.sum((e[triplets[:, 0]] - e[triplets[:, 1]]) ** 2, axis=1)
    an = jnp.sum((e[triplets[:, 0]] - e[triplets[:, 2]]) ** 2, axis=1)
    x = ap - an + margin
    if use_softplus:
        losses = jnp.logaddexp(0.0, beta * x) / beta
    else:
        losses = jnp.maximum(x, 0.0)
    return jnp.mean(losses)


if __name__ == "__main__":
    key = jax.random.PRNGKey(0)
    n, d = 8, 32                       # batch of 8 embeddings, hidden dim 32
    margin = 0.2
    labels = np.array([0, 0, 1, 1, 2, 2, 3, 3], dtype=np.int32)

    embeddings = jax.random.normal(key, (n, d), dtype=jnp.float32)
    triplets = jnp.asarray(all_valid_triplets(labels))     # (48, 3) int32

    # ReLU (default) path.
    loss = jax.block_until_ready(online_triplet_loss(embeddings, triplets, margin))
    ref = jax.block_until_ready(reference_loss(embeddings, triplets, margin))
    # Tolerance accommodates the MXU's default f32 contraction rounding for the
    # Gram matrix (set _GRAM_PRECISION = jax.lax.Precision.HIGHEST to tighten).
    assert np.allclose(np.asarray(loss), np.asarray(ref), rtol=2e-3, atol=2e-3), (loss, ref)

    # Softplus path.
    loss_sp = jax.block_until_ready(
        online_triplet_loss(embeddings, triplets, margin, beta=2.0, use_softplus=True))
    ref_sp = jax.block_until_ready(
        reference_loss(embeddings, triplets, margin, beta=2.0, use_softplus=True))
    assert np.allclose(np.asarray(loss_sp), np.asarray(ref_sp), rtol=2e-3, atol=2e-3), (
        loss_sp, ref_sp)

    # Empty-triplet guard (PyTorch would produce NaN from an empty .mean()).
    empty = jax.block_until_ready(
        online_triplet_loss(embeddings, jnp.zeros((0, 3), jnp.int32), margin))
    assert float(empty) == 0.0

    print("KERNEL_OK")
</pallas_src>

<mosaic_0001>
module attributes {stable_mosaic.version = 11 : i64} {
  func.func @_gram_tile_kernel(%arg0: i32, %arg1: i32, %arg2: memref<8x32xf32, #tpu.memory_space<vmem>>, %arg3: memref<8x32xf32, #tpu.memory_space<vmem>>, %arg4: memref<8x1xf32, #tpu.memory_space<vmem>>, %arg5: memref<1x8xf32, #tpu.memory_space<vmem>>, %arg6: memref<8x8xf32, #tpu.memory_space<vmem>>) attributes {dimension_semantics = [#tpu.dimension_semantics<parallel>, #tpu.dimension_semantics<parallel>], iteration_bounds = array<i64: 1, 1>, scalar_prefetch = 0 : i64, scratch_operands = 0 : i64, tpu.core_type = #tpu.core_type<tc>, window_params = [{transform_indices = @transform_0, window_bounds = array<i64: 8, 32>}, {transform_indices = @transform_1, window_bounds = array<i64: 8, 32>}, {transform_indices = @transform_2, window_bounds = array<i64: 8, 1>}, {transform_indices = @transform_3, window_bounds = array<i64: 1, 8>}, {transform_indices = @transform_4, window_bounds = array<i64: 8, 8>}]} {
    %c0 = arith.constant 0 : index
    %c0_0 = arith.constant 0 : index
    %0 = vector.load %arg2[%c0, %c0_0] : memref<8x32xf32, #tpu.memory_space<vmem>>, vector<8x32xf32>
    %c0_1 = arith.constant 0 : index
    %c0_2 = arith.constant 0 : index
    %1 = vector.load %arg3[%c0_1, %c0_2] : memref<8x32xf32, #tpu.memory_space<vmem>>, vector<8x32xf32>
    %cst = arith.constant dense<0.000000e+00> : vector<8x8xf32>
    %2 = tpu.matmul %0, %1, %cst {dimension_numbers = #tpu.dot_dimension_numbers<[1], [1], [0], [0], [0, 0, 1, 0], [], []>} : vector<8x32xf32>, vector<8x32xf32>, vector<8x8xf32> -> vector<8x8xf32>
    %c0_3 = arith.constant 0 : index
    %c0_4 = arith.constant 0 : index
    %3 = vector.load %arg4[%c0_3, %c0_4] : memref<8x1xf32, #tpu.memory_space<vmem>>, vector<8x1xf32>
    %4 = vector.broadcast %3 : vector<8x1xf32> to vector<8x8xf32>
    %5 = arith.mulf %2, %4 : vector<8x8xf32>
    %c0_5 = arith.constant 0 : index
    %c0_6 = arith.constant 0 : index
    %6 = vector.load %arg5[%c0_5, %c0_6] : memref<1x8xf32, #tpu.memory_space<vmem>>, vector<1x8xf32>
    %7 = vector.broadcast %6 : vector<1x8xf32> to vector<8x8xf32>
    %8 = arith.mulf %5, %7 : vector<8x8xf32>
    %c0_7 = arith.constant 0 : index
    %c0_8 = arith.constant 0 : index
    %9 = vector.load %arg6[%c0_7, %c0_8] : memref<8x8xf32, #tpu.memory_space<vmem>>, vector<8x8xf32>
    tpu.vector_store %arg6[%c0_7, %c0_8], %8 {strides = array<i32>} : memref<8x8xf32, #tpu.memory_space<vmem>>, vector<8x8xf32>,
    return
  }
  func.func @transform_0(%arg0: i32, %arg1: i32) -> (i32, i32) {
    %c0_i32 = arith.constant 0 : i32
    %c0_i32_0 = arith.constant 0 : i32
    return %arg0, %c0_i32 : i32, i32
  }
  func.func @transform_1(%arg0: i32, %arg1: i32) -> (i32, i32) {
    %c0_i32 = arith.constant 0 : i32
    %c0_i32_0 = arith.constant 0 : i32
    return %arg1, %c0_i32 : i32, i32
  }
  func.func @transform_2(%arg0: i32, %arg1: i32) -> (i32, i32) {
    %c0_i32 = arith.constant 0 : i32
    %c0_i32_0 = arith.constant 0 : i32
    return %arg0, %c0_i32 : i32, i32
  }
  func.func @transform_3(%arg0: i32, %arg1: i32) -> (i32, i32) {
    %c0_i32 = arith.constant 0 : i32
    %c0_i32_0 = arith.constant 0 : i32
    return %c0_i32, %arg1 : i32, i32
  }
  func.func @transform_4(%arg0: i32, %arg1: i32) -> (i32, i32) {
    %c0_i32 = arith.constant 0 : i32
    return %arg0, %arg1 : i32, i32
  }
}

</mosaic_0001>

<llo_original>
// kernel: tpu_custom_call.1
$region0: #{tpu_custom_call.1}
  #allocation0 [shape = 'u32[]', space=smem, size = 0x4, offset = 0x4, fixed_abs, tag = 'smem constant byte address 0x4 - core index']
  #allocation1 [shape = 'u32[72,128]{1,0:T(1,128)}', space=vmem, size = 0x9000, scoped, tag = 'internal scratch']
  %s0 = inlined_call_operand.vmem [shape: f32[8,32], index: 0, kind: input, shape index: {}]
  %s1 = inlined_call_operand.hbm [shape: f32[8,32], index: 1, kind: input, shape index: {}]
  %s2 = inlined_call_operand.vmem [shape: f32[8,1], index: 2, kind: input, shape index: {}]
  %s3 = inlined_call_operand.vmem [shape: f32[1,8], index: 3, kind: input, shape index: {}]
  %s4 = inlined_call_operand.hbm [shape: f32[8,8], index: 4, kind: output, shape index: {}]
  %s5 = sld [smem:[#allocation0]]
  $region30: #{tpu_custom_call.1} parent=0
    _
  %s7 = ssub.s32 1, %s5
  %s8 = scalar_select 0, %s7, %s5
  $region1: #{tpu_custom_call.1} parent=0
    #allocation2 [shape = 'u8[4096]{0}', space=vmem, size = 0x1000, scoped, tag = 'input window, operand 1, single buffered']
    #allocation3 [shape = 's32[1]{0}', space=sflag, size = 0x4, scoped, tag = 'scoped memory for tpu_custom_call.1']
    #allocation4 [shape = 's32[1]{0}', space=sflag, size = 0x4, scoped, tag = 'scoped memory for tpu_custom_call.1']
    #allocation5 [shape = 'u8[4096]{0}', space=vmem, size = 0x1000, scoped, tag = 'output window, operand 0, single buffered']
    %9 = vsyncpa [#allocation3], 0
    %10 = vsyncpa [#allocation4], 0
    // Predicated region
    $region2: #{tpu_custom_call.1} parent=1 // pred_check
      _
    $region3: #{tpu_custom_call.1} parent=1 // pred_check_branch
      %12 = sbr.rel (0) target = $region5
    $region4: #{tpu_custom_call.1} parent=1 // pred_region
      _
    $region5: #{tpu_custom_call.1} parent=1 // pred_fallthru
      _
    // Predicated region
    $region6: #{tpu_custom_call.1} parent=1 // pred_check
      _
    $region7: #{tpu_custom_call.1} parent=1 // pred_check_branch
      %14 = sbr.rel (0) target = $region9
    $region8: #{tpu_custom_call.1} parent=1 // pred_region
      %16 = vsyncadd [#allocation3], 0
      %s18 = sshll.u32 %s1, 4
      %s19 = int_to_ptr.hbm [resolvable:$true] %s18
      %s20 = sshll.u32 [#allocation2], 4
      %s21 = int_to_ptr.vmem [resolvable:$true] %s20
      %23 = dma.hbm_to_vmem [thread:$0]  %s19, 128, %s21, [#allocation3]
    $region9: #{tpu_custom_call.1} parent=1 // pred_fallthru
      _
    // Predicated region
    $region10: #{tpu_custom_call.1} parent=1 // pred_check
      _
    $region11: #{tpu_custom_call.1} parent=1 // pred_check_branch
      %25 = sbr.rel (0) target = $region13
    $region12: #{tpu_custom_call.1} parent=1 // pred_region
      _
    $region13: #{tpu_custom_call.1} parent=1 // pred_fallthru
      _
    // Predicated region
    $region14: #{tpu_custom_call.1} parent=1 // pred_check
      _
    $region15: #{tpu_custom_call.1} parent=1 // pred_check_branch
      %27 = sbr.rel (0) target = $region17
    $region16: #{tpu_custom_call.1} parent=1 // pred_region
      _
    $region17: #{tpu_custom_call.1} parent=1 // pred_fallthru
      _
    // Predicated region
    $region18: #{tpu_custom_call.1} parent=1 // pred_check
      _
    $region19: #{tpu_custom_call.1} parent=1 // pred_check_branch
      %29 = sbr.rel (0) target = $region21
    $region20: #{tpu_custom_call.1} parent=1 // pred_region
      %31 = dma.done [#allocation3], 128
    $region21: #{tpu_custom_call.1} parent=1 // pred_fallthru
      _
    %v32 = vld [vmem:[%s0] sm:$0xff]
    %v33 = vld [vmem:[#allocation2] sm:$0xff]
    %vm34 = vcmask 261120
    %v36 = vsel %vm34, %v32, 0
    %v39 = vsel %vm34, %v33, 0
    %41 = vmatpush.xpose.msra.mxu0 0.0
    %42 = vmatpush.xpose.msra.mxu0 0.0
    %43 = vmatpush.xpose.msra.mxu0 0.0
    %44 = vmatpush.xpose.msra.mxu0 0.0
    %45 = vmatpush.xpose.msra.mxu0 0.0
    %46 = vmatpush.xpose.msra.mxu0 0.0
    %47 = vmatpush.xpose.msra.mxu0 0.0
    %48 = vmatpush.xpose.msra.mxu0 0.0
    %49 = vmatpush.xpose.msra.mxu0 0.0
    %50 = vmatpush.xpose.msra.mxu0 0.0
    %51 = vmatpush.xpose.msra.mxu0 0.0
    %52 = vmatpush.xpose.msra.mxu0 0.0
    %53 = vmatpush.xpose.msra.mxu0 0.0
    %54 = vmatpush.xpose.msra.mxu0 0.0
    %55 = vmatpush.xpose.msra.mxu0 0.0
    %56 = vmatpush.xpose.msra.mxu0 %v39
    %57 = vmatmul.f32.gmra.mxu0 %v36
    %v58 = vpop.f32.mrf.mxu0
    %v59 = vadd.f32 0.0, %v58
    %60 = vdwg.mxu0
    %v61 = vld [vmem:[%s2] sm:$0xff]
    %63 = vset.pattern.permute.xlu0 0
    %64 = vperm.xlu0 %63, %v61
    %v65 = vpop.permute.xlu0 %64
    %v67 = vmul.f32 %v59, %v65
    %v68 = vld [vmem:[%s3] sm:$0x1]
    %v70 = vperm.slane %v68, 0
    %v72 = vmul.f32 %v67, %v70
    %vm73 = vcmask 64512
    %74 = vst.msk [vmem:[#allocation5] sm:$0xff] %vm73, %v72
    // Predicated region
    $region22: #{tpu_custom_call.1} parent=1 // pred_check
      _
    $region23: #{tpu_custom_call.1} parent=1 // pred_check_branch
      %76 = sbr.rel (0) target = $region25
    $region24: #{tpu_custom_call.1} parent=1 // pred_region
      %78 = vsyncadd [#allocation4], 0
      %s80 = sshll.u32 [#allocation5], 4
      %s81 = int_to_ptr.vmem [resolvable:$true] %s80
      %s82 = sshll.u32 %s4, 4
      %s83 = int_to_ptr.hbm [resolvable:$true] %s82
      %85 = dma.vmem_to_hbm [thread:$0]  %s81, 128, %s83, [#allocation4]
    $region25: #{tpu_custom_call.1} parent=1 // pred_fallthru
      _
    // Predicated region
    $region26: #{tpu_custom_call.1} parent=1 // pred_check
      _
    $region27: #{tpu_custom_call.1} parent=1 // pred_check_branch
      %87 = sbr.rel (0) target = $region29
    $region28: #{tpu_custom_call.1} parent=1 // pred_region
      %89 = dma.done [#allocation4], 128
    $region29: #{tpu_custom_call.1} parent=1 // pred_fallthru
      _
    %90 = vsyncpa [#allocation3], 1
    %91 = vsyncpa [#allocation4], 1

</llo_original>
